<compile_context>
chip_gen: v7x
topology: tpu7x:2x2x1
jax: 0.10.0
libtpu: 0.0.40
codegen_flags: <defaults>
</compile_context>

<pallas_src>
import jax
import jax.numpy as jnp
from jax import lax
from jax.experimental import pallas as pl
from jax.experimental.pallas import tpu as pltpu


def text_encoder_kernel(ids_ref, len_ref, emb_ref, out_ref):
    # ids_ref: VMEM (Bt, Lmax)   int32, padded slots already set to -1
    # len_ref: VMEM (Bt, 1)      int32, true sequence lengths
    # emb_ref: VMEM (T_pad, D)   float32, vocab padded to multiple of 128
    # out_ref: VMEM (Bt, D)      float32
    Bt, Lmax = ids_ref.shape
    T_pad, _ = emb_ref.shape

    ids = ids_ref[...]                                          # (Bt, Lmax)
    lens = len_ref[...]                                         # (Bt, 1)

    # Per-row reciprocal length, clamped so empty / batch-padded rows stay
    # finite.  Broadcast hoisted out of the token loop (JAX does not CSE
    # broadcast_in_dim).
    inv_len = 1.0 / jnp.maximum(lens, 1).astype(jnp.float32)    # (Bt, 1)
    inv_b = jnp.broadcast_to(inv_len, (Bt, T_pad))              # (Bt, T_pad)

    # Vocabulary iota on the lane axis (hoisted, reused every token step).
    tok_iota = lax.broadcasted_iota(jnp.int32, (1, T_pad), 1)

    # Vectorized one-hot accumulation with the mean weight folded in.
    # Static Python loop: Lmax is a small compile-time constant, fully visible
    # to the scheduler.  Padded slots carry id = -1 and never match.
    counts = jnp.zeros((Bt, T_pad), jnp.float32)
    for t in range(Lmax):
        hit = ids[:, t:t + 1] == tok_iota                       # (Bt, T_pad)
        counts = counts + jnp.where(hit, inv_b, 0.0)

    # Gather-and-mean as one MXU matmul: (Bt, T_pad) @ (T_pad, D) -> (Bt, D).
    out_ref[...] = jnp.dot(
        counts, emb_ref[...], preferred_element_type=jnp.float32
    ).astype(out_ref.dtype)


def text_encoder(token_ids, lengths, emb_table, *, block_b=128):
    """Mean-pooled embedding per sequence. Returns (B, D) float32."""
    B, Lmax = token_ids.shape
    T, D = emb_table.shape

    # --- Pad the vocabulary axis to a lane-dense multiple of 128. ----------
    T_pad = max(128, ((T + 127) // 128) * 128)
    if T_pad != T:
        emb_table = jnp.pad(emb_table, ((0, T_pad - T), (0, 0)))
    emb_table = emb_table.astype(jnp.float32)

    # --- Pre-mask padded token slots to -1 (never a valid vocab id). -------
    lengths = lengths.astype(jnp.int32)
    pos = jnp.arange(Lmax, dtype=jnp.int32)[None, :]
    ids = jnp.where(pos < lengths[:, None], token_ids.astype(jnp.int32), -1)

    # --- Batch tiling: keep Bt large (default 128, multiple of 8). ---------
    B_round = max(8, ((B + 7) // 8) * 8)
    Bt = min(block_b, B_round)
    Bt = max(8, (Bt // 8) * 8)
    # v7x has 2 TensorCores: if one block covers the whole batch and it is
    # still >= 64 rows after splitting, use two blocks so both cores get work.
    if pl.cdiv(B_round, Bt) == 1 and Bt >= 128 and Bt % 16 == 0:
        Bt //= 2
    n_blocks = pl.cdiv(B_round, Bt)
    B_pad = n_blocks * Bt

    # Pad the batch: padded rows get id = -1 and length 0 -> all-zero counts,
    # clamped divisor, harmless output rows that are sliced off below.
    if B_pad != B:
        ids = jnp.pad(ids, ((0, B_pad - B), (0, 0)), constant_values=-1)
        lengths = jnp.pad(lengths, (0, B_pad - B))
    lens2d = lengths.reshape(B_pad, 1)

    grid_spec = pltpu.PrefetchScalarGridSpec(
        num_scalar_prefetch=0,
        grid=(n_blocks,),
        in_specs=[
            pl.BlockSpec((Bt, Lmax), lambda i: (i, 0)),      # token ids
            pl.BlockSpec((Bt, 1), lambda i: (i, 0)),         # lengths
            pl.BlockSpec((T_pad, D), lambda i: (0, 0)),      # emb table (resident)
        ],
        out_specs=pl.BlockSpec((Bt, D), lambda i: (i, 0)),
    )

    out = pl.pallas_call(
        text_encoder_kernel,
        out_shape=jax.ShapeDtypeStruct((B_pad, D), jnp.float32),
        grid_spec=grid_spec,
        compiler_params=pltpu.CompilerParams(
            dimension_semantics=("parallel",)),   # independent output blocks
    )(ids, lens2d, emb_table)

    return out[:B]


if __name__ == "__main__":
    token_num = 64     # vocabulary size
    emb_dim = 128      # embedding dim (lane-dense)
    B = 16             # number of sequences in `data`
    Lmax = 8           # padded sequence length

    key = jax.random.PRNGKey(0)
    k_emb, k_ids, k_len = jax.random.split(key, 3)

    # Deterministic parameter init (nn.Embedding default ~ N(0, 1)).
    emb_table = jax.random.normal(k_emb, (token_num, emb_dim), dtype=jnp.float32)

    # Variable-length token-id sequences, padded to Lmax.
    lengths = jax.random.randint(k_len, (B,), 1, Lmax + 1, dtype=jnp.int32)
    raw_ids = jax.random.randint(k_ids, (B, Lmax), 0, token_num, dtype=jnp.int32)
    pos = jnp.arange(Lmax, dtype=jnp.int32)[None, :]
    token_ids = jnp.where(pos < lengths[:, None], raw_ids, 0)

    # Default (production) configuration: one large batch block.
    out = text_encoder(token_ids, lengths, emb_table)
    out = jax.block_until_ready(out)

    # Pure-JAX reference of the PyTorch forward (per-sequence mean, stacked).
    ref_rows = []
    for b in range(B):
        L = int(lengths[b])
        ref_rows.append(jnp.mean(emb_table[token_ids[b, :L]], axis=0))
    ref = jnp.stack(ref_rows)

    assert out.shape == (B, emb_dim) and out.dtype == jnp.float32
    assert jnp.allclose(out, ref, rtol=1e-5, atol=1e-5)

    # Correctness-only check of the multi-block grid + batch-padding path
    # (small Bt is never used in production, see the perf notes above).
    out2 = jax.block_until_ready(
        text_encoder(token_ids, lengths, emb_table, block_b=8))
    assert jnp.allclose(out2, ref, rtol=1e-5, atol=1e-5)

    print("KERNEL_OK")
</pallas_src>

<mosaic_0001>
module attributes {stable_mosaic.version = 11 : i64} {
  func.func @text_encoder_kernel(%arg0: i32, %arg1: memref<16x8xi32, #tpu.memory_space<vmem>>, %arg2: memref<16x1xi32, #tpu.memory_space<vmem>>, %arg3: memref<128x128xf32, #tpu.memory_space<vmem>>, %arg4: memref<16x128xf32, #tpu.memory_space<vmem>>) attributes {dimension_semantics = [#tpu.dimension_semantics<parallel>], iteration_bounds = array<i64: 1>, scalar_prefetch = 0 : i64, scratch_operands = 0 : i64, tpu.core_type = #tpu.core_type<tc>, window_params = [{transform_indices = @transform_0, window_bounds = array<i64: 16, 8>}, {transform_indices = @transform_1, window_bounds = array<i64: 16, 1>}, {pipeline_mode = #tpu.pipeline_mode<synchronous>, transform_indices = @transform_2, window_bounds = array<i64: 128, 128>}, {transform_indices = @transform_3, window_bounds = array<i64: 16, 128>}]} {
    %c0 = arith.constant 0 : index
    %c0_0 = arith.constant 0 : index
    %0 = vector.load %arg1[%c0, %c0_0] : memref<16x8xi32, #tpu.memory_space<vmem>>, vector<16x8xi32>
    %c0_1 = arith.constant 0 : index
    %c0_2 = arith.constant 0 : index
    %1 = vector.load %arg2[%c0_1, %c0_2] : memref<16x1xi32, #tpu.memory_space<vmem>>, vector<16x1xi32>
    %c1_i32 = arith.constant 1 : i32
    %2 = vector.broadcast %c1_i32 : i32 to vector<16x1xi32>
    %3 = arith.maxsi %1, %2 : vector<16x1xi32>
    %4 = arith.sitofp %3 : vector<16x1xi32> to vector<16x1xf32>
    %cst = arith.constant 1.000000e+00 : f32
    %5 = vector.broadcast %cst : f32 to vector<16x1xf32>
    %6 = arith.divf %5, %4 : vector<16x1xf32>
    %7 = vector.shape_cast %6 : vector<16x1xf32> to vector<16x1xf32>
    %8 = vector.broadcast %7 : vector<16x1xf32> to vector<16x128xf32>
    %9 = tpu.iota {dimensions = array<i32: 1>} : vector<1x128xi32>
    %cst_3 = arith.constant 0.000000e+00 : f32
    %10 = vector.broadcast %cst_3 : f32 to vector<16x128xf32>
    %11 = vector.extract_strided_slice %0 {offsets = [0, 0], sizes = [16, 1], strides = [1, 1]} : vector<16x8xi32> to vector<16x1xi32>
    %12 = vector.broadcast %11 : vector<16x1xi32> to vector<16x128xi32>
    %13 = vector.broadcast %9 : vector<1x128xi32> to vector<16x128xi32>
    %14 = arith.cmpi eq, %12, %13 : vector<16x128xi32>
    %cst_4 = arith.constant 0.000000e+00 : f32
    %15 = vector.broadcast %cst_4 : f32 to vector<16x128xf32>
    %16 = arith.select %14, %8, %15 : vector<16x128xi1>, vector<16x128xf32>
    %17 = arith.addf %10, %16 : vector<16x128xf32>
    %18 = vector.extract_strided_slice %0 {offsets = [0, 1], sizes = [16, 1], strides = [1, 1]} : vector<16x8xi32> to vector<16x1xi32>
    %19 = vector.broadcast %18 : vector<16x1xi32> to vector<16x128xi32>
    %20 = vector.broadcast %9 : vector<1x128xi32> to vector<16x128xi32>
    %21 = arith.cmpi eq, %19, %20 : vector<16x128xi32>
    %cst_5 = arith.constant 0.000000e+00 : f32
    %22 = vector.broadcast %cst_5 : f32 to vector<16x128xf32>
    %23 = arith.select %21, %8, %22 : vector<16x128xi1>, vector<16x128xf32>
    %24 = arith.addf %17, %23 : vector<16x128xf32>
    %25 = vector.extract_strided_slice %0 {offsets = [0, 2], sizes = [16, 1], strides = [1, 1]} : vector<16x8xi32> to vector<16x1xi32>
    %26 = vector.broadcast %25 : vector<16x1xi32> to vector<16x128xi32>
    %27 = vector.broadcast %9 : vector<1x128xi32> to vector<16x128xi32>
    %28 = arith.cmpi eq, %26, %27 : vector<16x128xi32>
    %cst_6 = arith.constant 0.000000e+00 : f32
    %29 = vector.broadcast %cst_6 : f32 to vector<16x128xf32>
    %30 = arith.select %28, %8, %29 : vector<16x128xi1>, vector<16x128xf32>
    %31 = arith.addf %24, %30 : vector<16x128xf32>
    %32 = vector.extract_strided_slice %0 {offsets = [0, 3], sizes = [16, 1], strides = [1, 1]} : vector<16x8xi32> to vector<16x1xi32>
    %33 = vector.broadcast %32 : vector<16x1xi32> to vector<16x128xi32>
    %34 = vector.broadcast %9 : vector<1x128xi32> to vector<16x128xi32>
    %35 = arith.cmpi eq, %33, %34 : vector<16x128xi32>
    %cst_7 = arith.constant 0.000000e+00 : f32
    %36 = vector.broadcast %cst_7 : f32 to vector<16x128xf32>
    %37 = arith.select %35, %8, %36 : vector<16x128xi1>, vector<16x128xf32>
    %38 = arith.addf %31, %37 : vector<16x128xf32>
    %39 = vector.extract_strided_slice %0 {offsets = [0, 4], sizes = [16, 1], strides = [1, 1]} : vector<16x8xi32> to vector<16x1xi32>
    %40 = vector.broadcast %39 : vector<16x1xi32> to vector<16x128xi32>
    %41 = vector.broadcast %9 : vector<1x128xi32> to vector<16x128xi32>
    %42 = arith.cmpi eq, %40, %41 : vector<16x128xi32>
    %cst_8 = arith.constant 0.000000e+00 : f32
    %43 = vector.broadcast %cst_8 : f32 to vector<16x128xf32>
    %44 = arith.select %42, %8, %43 : vector<16x128xi1>, vector<16x128xf32>
    %45 = arith.addf %38, %44 : vector<16x128xf32>
    %46 = vector.extract_strided_slice %0 {offsets = [0, 5], sizes = [16, 1], strides = [1, 1]} : vector<16x8xi32> to vector<16x1xi32>
    %47 = vector.broadcast %46 : vector<16x1xi32> to vector<16x128xi32>
    %48 = vector.broadcast %9 : vector<1x128xi32> to vector<16x128xi32>
    %49 = arith.cmpi eq, %47, %48 : vector<16x128xi32>
    %cst_9 = arith.constant 0.000000e+00 : f32
    %50 = vector.broadcast %cst_9 : f32 to vector<16x128xf32>
    %51 = arith.select %49, %8, %50 : vector<16x128xi1>, vector<16x128xf32>
    %52 = arith.addf %45, %51 : vector<16x128xf32>
    %53 = vector.extract_strided_slice %0 {offsets = [0, 6], sizes = [16, 1], strides = [1, 1]} : vector<16x8xi32> to vector<16x1xi32>
    %54 = vector.broadcast %53 : vector<16x1xi32> to vector<16x128xi32>
    %55 = vector.broadcast %9 : vector<1x128xi32> to vector<16x128xi32>
    %56 = arith.cmpi eq, %54, %55 : vector<16x128xi32>
    %cst_10 = arith.constant 0.000000e+00 : f32
    %57 = vector.broadcast %cst_10 : f32 to vector<16x128xf32>
    %58 = arith.select %56, %8, %57 : vector<16x128xi1>, vector<16x128xf32>
    %59 = arith.addf %52, %58 : vector<16x128xf32>
    %60 = vector.extract_strided_slice %0 {offsets = [0, 7], sizes = [16, 1], strides = [1, 1]} : vector<16x8xi32> to vector<16x1xi32>
    %61 = vector.broadcast %60 : vector<16x1xi32> to vector<16x128xi32>
    %62 = vector.broadcast %9 : vector<1x128xi32> to vector<16x128xi32>
    %63 = arith.cmpi eq, %61, %62 : vector<16x128xi32>
    %cst_11 = arith.constant 0.000000e+00 : f32
    %64 = vector.broadcast %cst_11 : f32 to vector<16x128xf32>
    %65 = arith.select %63, %8, %64 : vector<16x128xi1>, vector<16x128xf32>
    %66 = arith.addf %59, %65 : vector<16x128xf32>
    %c0_12 = arith.constant 0 : index
    %c0_13 = arith.constant 0 : index
    %67 = vector.load %arg3[%c0_12, %c0_13] : memref<128x128xf32, #tpu.memory_space<vmem>>, vector<128x128xf32>
    %cst_14 = arith.constant dense<0.000000e+00> : vector<16x128xf32>
    %68 = tpu.matmul %66, %67, %cst_14 {dimension_numbers = #tpu.dot_dimension_numbers<[1], [0], [0], [1], [0, 0, 1, 1], [], []>} : vector<16x128xf32>, vector<128x128xf32>, vector<16x128xf32> -> vector<16x128xf32>
    %c0_15 = arith.constant 0 : index
    %c0_16 = arith.constant 0 : index
    %69 = vector.load %arg4[%c0_15, %c0_16] : memref<16x128xf32, #tpu.memory_space<vmem>>, vector<16x128xf32>
    tpu.vector_store %arg4[%c0_15, %c0_16], %68 {strides = array<i32>} : memref<16x128xf32, #tpu.memory_space<vmem>>, vector<16x128xf32>,
    return
  }
  func.func @transform_0(%arg0: i32) -> (i32, i32) {
    %c0_i32 = arith.constant 0 : i32
    %c0_i32_0 = arith.constant 0 : i32
    return %arg0, %c0_i32 : i32, i32
  }
  func.func @transform_1(%arg0: i32) -> (i32, i32) {
    %c0_i32 = arith.constant 0 : i32
    %c0_i32_0 = arith.constant 0 : i32
    return %arg0, %c0_i32 : i32, i32
  }
  func.func @transform_2(%arg0: i32) -> (i32, i32) {
    %c0_i32 = arith.constant 0 : i32
    %c0_i32_0 = arith.constant 0 : i32
    %c0_i32_1 = arith.constant 0 : i32
    return %c0_i32, %c0_i32_0 : i32, i32
  }
  func.func @transform_3(%arg0: i32) -> (i32, i32) {
    %c0_i32 = arith.constant 0 : i32
    %c0_i32_0 = arith.constant 0 : i32
    return %arg0, %c0_i32 : i32, i32
  }
}

</mosaic_0001>

<llo_original>
// kernel: tpu_custom_call.1
$region0: #{tpu_custom_call.1}
  #allocation0 [shape = 'u32[]', space=smem, size = 0x4, offset = 0x4, fixed_abs, tag = 'smem constant byte address 0x4 - core index']
  #allocation1 [shape = 'u32[144,128]{1,0:T(1,128)}', space=vmem, size = 0x12000, scoped, tag = 'internal scratch']
  %s0 = inlined_call_operand.vmem [shape: s32[16,8], index: 0, kind: input, shape index: {}]
  %s1 = inlined_call_operand.vmem [shape: s32[16,1], index: 1, kind: input, shape index: {}]
  %s2 = inlined_call_operand.hbm [shape: f32[128,128], index: 2, kind: input, shape index: {}]
  %s3 = inlined_call_operand.hbm [shape: f32[16,128], index: 3, kind: output, shape index: {}]
  %s4 = sld [smem:[#allocation0]]
  $region26: #{tpu_custom_call.1} parent=0
    _
  %s6 = ssub.s32 1, %s4
  %s7 = scalar_select 0, %s6, %s4
  $region1: #{tpu_custom_call.1} parent=0
    #allocation2 [shape = 'u8[65536]{0}', space=vmem, size = 0x10000, scoped, tag = 'input window, operand 2, single buffered']
    #allocation3 [shape = 's32[1]{0}', space=sflag, size = 0x4, scoped, tag = 'scoped memory for tpu_custom_call.1']
    #allocation4 [shape = 's32[1]{0}', space=sflag, size = 0x4, scoped, tag = 'scoped memory for tpu_custom_call.1']
    #allocation5 [shape = 'u8[8192]{0}', space=vmem, size = 0x2000, scoped, tag = 'output window, operand 0, single buffered']
    %8 = vsyncpa [#allocation3], 0
    %9 = vsyncpa [#allocation4], 0
    // Predicated region
    $region2: #{tpu_custom_call.1} parent=1 // pred_check
      _
    $region3: #{tpu_custom_call.1} parent=1 // pred_check_branch
      %11 = sbr.rel (0) target = $region5
    $region4: #{tpu_custom_call.1} parent=1 // pred_region
      _
    $region5: #{tpu_custom_call.1} parent=1 // pred_fallthru
      _
    // Predicated region
    $region6: #{tpu_custom_call.1} parent=1 // pred_check
      _
    $region7: #{tpu_custom_call.1} parent=1 // pred_check_branch
      %13 = sbr.rel (0) target = $region9
    $region8: #{tpu_custom_call.1} parent=1 // pred_region
      _
    $region9: #{tpu_custom_call.1} parent=1 // pred_fallthru
      _
    // Predicated region
    $region10: #{tpu_custom_call.1} parent=1 // pred_check
      _
    $region11: #{tpu_custom_call.1} parent=1 // pred_check_branch
      %15 = sbr.rel (0) target = $region13
    $region12: #{tpu_custom_call.1} parent=1 // pred_region
      %s17 = ssub.s32 2048, 2048
      %18 = vsyncadd [#allocation3], %s17
      %s19 = sshll.u32 [#allocation2], 4
      %s20 = int_to_ptr.vmem [resolvable:$true] %s19
      %25 = dma.hbm_to_vmem [thread:$0]  %s2, 2048, %s20, [#allocation3], 128, 128, 8
    $region13: #{tpu_custom_call.1} parent=1 // pred_fallthru
      _
    // Predicated region
    $region14: #{tpu_custom_call.1} parent=1 // pred_check
      _
    $region15: #{tpu_custom_call.1} parent=1 // pred_check_branch
      %27 = sbr.rel (0) target = $region17
    $region16: #{tpu_custom_call.1} parent=1 // pred_region
      %28 = dma.done [#allocation3], 2048
    $region17: #{tpu_custom_call.1} parent=1 // pred_fallthru
      _
    %v29 = vld [vmem:[%s0] sm:$0xff]
    %v30 = vld [vmem:[%s0 + $0x8] sm:$0xff]
    %v31 = vld [vmem:[%s1] sm:$0xff]
    %v32 = vld [vmem:[%s1 + $0x8] sm:$0xff]
    %vm33 = vcmp.gt.s32.totalorder %v31, 1
    %v34 = vsel %vm33, %v31, 1
    %vm35 = vcmp.gt.s32.totalorder %v32, 1
    %v36 = vsel %vm35, %v32, 1
    %v37 = vcvt.s32.f32 %v34
    %v38 = vcvt.s32.f32 %v36
    %v39 = vrcp.pop %v37
    %v40 = vmul.f32 1.0, %v39
    %v41 = vrcp.pop %v38
    %v42 = vmul.f32 1.0, %v41
    %44 = vset.pattern.permute.xlu0 0
    %45 = vperm.xlu0 %44, %v40
    %v46 = vpop.permute.xlu0 %45
    %49 = vset.pattern.permute.xlu0 0
    %50 = vperm.xlu0 %49, %v42
    %v51 = vpop.permute.xlu0 %50
    %v53 = vlaneseq
    %v54 = vand.u32 %v53, 127
    %55 = vset.pattern.permute.xlu0 0
    %56 = vperm.xlu0 %55, %v29
    %v57 = vpop.permute.xlu0 %56
    %58 = vset.pattern.permute.xlu0 0
    %59 = vperm.xlu0 %58, %v30
    %v60 = vpop.permute.xlu0 %59
    %vm61 = vcmp.eq.s32.totalorder %v57, %v54
    %vm62 = vcmp.eq.s32.totalorder %v60, %v54
    %v63 = vsel %vm61, %v46, 0.0
    %v64 = vsel %vm62, %v51, 0.0
    %v65 = vadd.f32 %v63, 0.0
    %v66 = vadd.f32 %v64, 0.0
    %67 = vset.pattern.permute.xlu0 1
    %68 = vperm.xlu0 %67, %v29
    %v69 = vpop.permute.xlu0 %68
    %70 = vset.pattern.permute.xlu0 1
    %71 = vperm.xlu0 %70, %v30
    %v72 = vpop.permute.xlu0 %71
    %vm73 = vcmp.eq.s32.totalorder %v69, %v54
    %vm74 = vcmp.eq.s32.totalorder %v72, %v54
    %v75 = vsel %vm73, %v46, 0.0
    %v76 = vsel %vm74, %v51, 0.0
    %v77 = vadd.f32 %v65, %v75
    %v78 = vadd.f32 %v66, %v76
    %79 = vset.pattern.permute.xlu0 2
    %80 = vperm.xlu0 %79, %v29
    %v81 = vpop.permute.xlu0 %80
    %82 = vset.pattern.permute.xlu0 2
    %83 = vperm.xlu0 %82, %v30
    %v84 = vpop.permute.xlu0 %83
    %vm85 = vcmp.eq.s32.totalorder %v81, %v54
    %vm86 = vcmp.eq.s32.totalorder %v84, %v54
    %v87 = vsel %vm85, %v46, 0.0
    %v88 = vsel %vm86, %v51, 0.0
    %v89 = vadd.f32 %v77, %v87
    %v90 = vadd.f32 %v78, %v88
    %91 = vset.pattern.permute.xlu0 3
    %92 = vperm.xlu0 %91, %v29
    %v93 = vpop.permute.xlu0 %92
    %94 = vset.pattern.permute.xlu0 3
    %95 = vperm.xlu0 %94, %v30
    %v96 = vpop.permute.xlu0 %95
    %vm97 = vcmp.eq.s32.totalorder %v93, %v54
    %vm98 = vcmp.eq.s32.totalorder %v96, %v54
    %v99 = vsel %vm97, %v46, 0.0
    %v100 = vsel %vm98, %v51, 0.0
    %v101 = vadd.f32 %v89, %v99
    %v102 = vadd.f32 %v90, %v100
    %103 = vset.pattern.permute.xlu0 4
    %104 = vperm.xlu0 %103, %v29
    %v105 = vpop.permute.xlu0 %104
    %106 = vset.pattern.permute.xlu0 4
    %107 = vperm.xlu0 %106, %v30
    %v108 = vpop.permute.xlu0 %107
    %vm109 = vcmp.eq.s32.totalorder %v105, %v54
    %vm110 = vcmp.eq.s32.totalorder %v108, %v54
    %v111 = vsel %vm109, %v46, 0.0
    %v112 = vsel %vm110, %v51, 0.0
    %v113 = vadd.f32 %v101, %v111
    %v114 = vadd.f32 %v102, %v112
    %115 = vset.pattern.permute.xlu0 5
    %116 = vperm.xlu0 %115, %v29
    %v117 = vpop.permute.xlu0 %116
    %118 = vset.pattern.permute.xlu0 5
    %119 = vperm.xlu0 %118, %v30
    %v120 = vpop.permute.xlu0 %119
    %vm121 = vcmp.eq.s32.totalorder %v117, %v54
    %vm122 = vcmp.eq.s32.totalorder %v120, %v54
    %v123 = vsel %vm121, %v46, 0.0
    %v124 = vsel %vm122, %v51, 0.0
    %v125 = vadd.f32 %v113, %v123
    %v126 = vadd.f32 %v114, %v124
    %127 = vset.pattern.permute.xlu0 6
    %128 = vperm.xlu0 %127, %v29
    %v129 = vpop.permute.xlu0 %128
    %130 = vset.pattern.permute.xlu0 6
    %131 = vperm.xlu0 %130, %v30
    %v132 = vpop.permute.xlu0 %131
    %vm133 = vcmp.eq.s32.totalorder %v129, %v54
    %vm134 = vcmp.eq.s32.totalorder %v132, %v54
    %v135 = vsel %vm133, %v46, 0.0
    %v136 = vsel %vm134, %v51, 0.0
    %v137 = vadd.f32 %v125, %v135
    %v138 = vadd.f32 %v126, %v136
    %139 = vset.pattern.permute.xlu0 7
    %140 = vperm.xlu0 %139, %v29
    %v141 = vpop.permute.xlu0 %140
    %142 = vset.pattern.permute.xlu0 7
    %143 = vperm.xlu0 %142, %v30
    %v144 = vpop.permute.xlu0 %143
    %vm145 = vcmp.eq.s32.totalorder %v141, %v54
    %vm146 = vcmp.eq.s32.totalorder %v144, %v54
    %v147 = vsel %vm145, %v46, 0.0
    %v148 = vsel %vm146, %v51, 0.0
    %v149 = vadd.f32 %v137, %v147
    %v150 = vadd.f32 %v138, %v148
    %v151 = vld [vmem:[#allocation2] sm:$0xff]
    %v152 = vld [vmem:[#allocation2 + $0x8] sm:$0xff]
    %v153 = vld [vmem:[#allocation2 + $0x10] sm:$0xff]
    %v154 = vld [vmem:[#allocation2 + $0x18] sm:$0xff]
    %v155 = vld [vmem:[#allocation2 + $0x20] sm:$0xff]
    %v156 = vld [vmem:[#allocation2 + $0x28] sm:$0xff]
    %v157 = vld [vmem:[#allocation2 + $0x30] sm:$0xff]
    %v158 = vld [vmem:[#allocation2 + $0x38] sm:$0xff]
    %v159 = vld [vmem:[#allocation2 + $0x40] sm:$0xff]
    %v160 = vld [vmem:[#allocation2 + $0x48] sm:$0xff]
    %v161 = vld [vmem:[#allocation2 + $0x50] sm:$0xff]
    %v162 = vld [vmem:[#allocation2 + $0x58] sm:$0xff]
    %v163 = vld [vmem:[#allocation2 + $0x60] sm:$0xff]
    %v164 = vld [vmem:[#allocation2 + $0x68] sm:$0xff]
    %v165 = vld [vmem:[#allocation2 + $0x70] sm:$0xff]
    %v166 = vld [vmem:[#allocation2 + $0x78] sm:$0xff]
    %167 = vmatprep.subr.mxu0 0.0
    %168 = vmatpush1.msra.mxu0 %v151
    %169 = vmatprep.subr.mxu0 0.0
    %170 = vmatpush1.msra.mxu0 %v152
    %171 = vmatprep.subr.mxu0 0.0
    %172 = vmatpush1.msra.mxu0 %v153
    %173 = vmatprep.subr.mxu0 0.0
    %174 = vmatpush1.msra.mxu0 %v154
    %175 = vmatprep.subr.mxu0 0.0
    %176 = vmatpush1.msra.mxu0 %v155
    %177 = vmatprep.subr.mxu0 0.0
    %178 = vmatpush1.msra.mxu0 %v156
    %179 = vmatprep.subr.mxu0 0.0
    %180 = vmatpush1.msra.mxu0 %v157
    %181 = vmatprep.subr.mxu0 0.0
    %182 = vmatpush1.msra.mxu0 %v158
    %183 = vmatprep.subr.mxu0 0.0
    %184 = vmatpush1.msra.mxu0 %v159
    %185 = vmatprep.subr.mxu0 0.0
    %186 = vmatpush1.msra.mxu0 %v160
    %187 = vmatprep.subr.mxu0 0.0
    %188 = vmatpush1.msra.mxu0 %v161
    %189 = vmatprep.subr.mxu0 0.0
    %190 = vmatpush1.msra.mxu0 %v162
    %191 = vmatprep.subr.mxu0 0.0
    %192 = vmatpush1.msra.mxu0 %v163
    %193 = vmatprep.subr.mxu0 0.0
    %194 = vmatpush1.msra.mxu0 %v164
    %195 = vmatprep.subr.mxu0 0.0
    %196 = vmatpush1.msra.mxu0 %v165
    %197 = vmatprep.subr.mxu0 0.0
    %198 = vmatpush1.msra.mxu0 %v166
    %199 = vmatprep.subr.mxu0 0.0
    %200 = vmatpush1.msra.mxu0 0.0
    %201 = vmatprep.subr.mxu0 0.0
    %202 = vmatpush1.msra.mxu0 0.0
    %203 = vmatprep.subr.mxu0 0.0
    %204 = vmatpush1.msra.mxu0 0.0
    %205 = vmatprep.subr.mxu0 0.0
    %206 = vmatpush1.msra.mxu0 0.0
    %207 = vmatprep.subr.mxu0 0.0
    %208 = vmatpush1.msra.mxu0 0.0
    %209 = vmatprep.subr.mxu0 0.0
    %210 = vmatpush1.msra.mxu0 0.0
    %211 = vmatprep.subr.mxu0 0.0
    %212 = vmatpush1.msra.mxu0 0.0
    %213 = vmatprep.subr.mxu0 0.0
    %214 = vmatpush1.msra.mxu0 0.0
    %215 = vmatprep.subr.mxu0 0.0
    %216 = vmatpush1.msra.mxu0 0.0
    %217 = vmatprep.subr.mxu0 0.0
    %218 = vmatpush1.msra.mxu0 0.0
    %219 = vmatprep.subr.mxu0 0.0
    %220 = vmatpush1.msra.mxu0 0.0
    %221 = vmatprep.subr.mxu0 0.0
    %222 = vmatpush1.msra.mxu0 0.0
    %223 = vmatprep.subr.mxu0 0.0
    %224 = vmatpush1.msra.mxu0 0.0
    %225 = vmatprep.subr.mxu0 0.0
    %226 = vmatpush1.msra.mxu0 0.0
    %227 = vmatprep.subr.mxu0 0.0
    %228 = vmatpush1.msra.mxu0 0.0
    %229 = vmatprep.subr.mxu0 0.0
    %230 = vmatpush1.msra.mxu0 0.0
    %231 = vmatprep.mubr.f32.mxu0 0.0
    %232 = vmatmul.mubr.f32.gmra.mrb[0].mxu0 %v149
    %v233 = vpop.f32.mrb[0].mxu0
    %v234 = vadd.f32 0.0, %v233
    %v235 = vpop.f32.mrb[0].mxu0
    %236 = vmatprep.mubr.f32.mxu0 0.0
    %237 = vmatmul.mubr.f32.gmra.mrb[0].mxu0 %v150
    %v238 = vpop.f32.mrb[0].mxu0
    %v239 = vadd.f32 0.0, %v238
    %v240 = vpop.f32.mrb[0].mxu0
    %241 = vdwg.mxu0
    %242 = vst [vmem:[#allocation5] sm:$0xff] %v234
    %243 = vst [vmem:[#allocation5 + $0x8] sm:$0xff] %v239
    // Predicated region
    $region18: #{tpu_custom_call.1} parent=1 // pred_check
      _
    $region19: #{tpu_custom_call.1} parent=1 // pred_check_branch
      %245 = sbr.rel (0) target = $region21
    $region20: #{tpu_custom_call.1} parent=1 // pred_region
      %s247 = ssub.s32 256, 256
      %248 = vsyncadd [#allocation4], %s247
      %s249 = sshll.u32 [#allocation5], 4
      %s250 = int_to_ptr.vmem [resolvable:$true] %s249
      %255 = dma.vmem_to_hbm [thread:$0]  %s250, 256, %s3, [#allocation4], 128, 128, 8
    $region21: #{tpu_custom_call.1} parent=1 // pred_fallthru
      _
    // Predicated region
    $region22: #{tpu_custom_call.1} parent=1 // pred_check
      _
    $region23: #{tpu_custom_call.1} parent=1 // pred_check_branch
      %257 = sbr.rel (0) target = $region25
    $region24: #{tpu_custom_call.1} parent=1 // pred_region
      %258 = dma.done [#allocation4], 256
    $region25: #{tpu_custom_call.1} parent=1 // pred_fallthru
      _
    %259 = vsyncpa [#allocation3], 1
    %260 = vsyncpa [#allocation4], 1

</llo_original>
